<compile_context>
chip_gen: v7x
topology: tpu7x:2x2x1
jax: 0.10.0
libtpu: 0.0.40
codegen_flags: <defaults>
</compile_context>

<pallas_src>
import jax
import jax.numpy as jnp
from jax import lax
from jax.experimental import pallas as pl
from jax.experimental.pallas import tpu as pltpu


def _cdiv(a, b):
    return -(-a // b)


def _vmem_budget_bytes():
    """Generation-aware scoped-VMEM budget: ~half of physical VMEM, capped at 64 MiB."""
    cap = 128 * 1024 * 1024
    try:
        info = pltpu.get_tpu_info()
        cap = int(getattr(info, "vmem_capacity_bytes", cap))
    except Exception:
        pass
    return max(16 * 1024 * 1024, min(cap // 2, 64 * 1024 * 1024))


def _pick_channel_block(C):
    """Largest multiple-of-8 candidate dividing C (fallback: full C), then split
    so the 'parallel' channel axis has >= 2 blocks for v7x's 2 TensorCores."""
    cb = C
    for cand in (512, 256, 128, 64, 32, 16, 8):
        if C % cand == 0:
            cb = cand
            break
    if C // cb == 1 and cb % 16 == 0:
        cb //= 2
    return cb


def _make_stats_kernel(eps, inv_count, nb, chunk_bounds, L, lt, need_mask):
    def stats_kernel(x_ref, w_ref, b_ref, scale_ref, shift_ref, sum_acc, sq_acc):
        n = pl.program_id(1)
        l = pl.program_id(2)

        @pl.when((n == 0) & (l == 0))
        def _init():
            sum_acc[...] = jnp.zeros_like(sum_acc)
            sq_acc[...] = jnp.zeros_like(sq_acc)

        # Lane-wide fp32 partial sums: every 128-lane chunk is accumulated with
        # plain VPU adds; no cross-lane (XLU) reduce inside the hot loop.
        acc = sum_acc[...]
        sq = sq_acc[...]
        if need_mask:
            lane = lax.broadcasted_iota(jnp.int32, acc.shape, 1)
            rem = L - l * lt  # valid lanes remaining in this lane-tile
        for i in range(nb):
            for (lo, hi) in chunk_bounds:
                chunk = x_ref[i, :, lo:hi].astype(jnp.float32)
                if need_mask:
                    chunk = jnp.where(lane < (rem - lo), chunk, 0.0)
                acc = acc + chunk
                sq = sq + chunk * chunk
        sum_acc[...] = acc
        sq_acc[...] = sq

        @pl.when((n == pl.num_programs(1) - 1) & (l == pl.num_programs(2) - 1))
        def _finalize():
            # Single cross-lane reduce per channel block (cheap, off the hot path).
            total = jnp.sum(sum_acc[...], axis=1, keepdims=True)
            total_sq = jnp.sum(sq_acc[...], axis=1, keepdims=True)
            mean = total * inv_count
            # E[x^2] - mean^2 (same formula as the module's sync branch); the
            # 128 lane-partial accumulators keep cancellation error small.
            var = total_sq * inv_count - mean * mean
            invstd = lax.rsqrt(var + eps)
            scale = w_ref[...] * invstd
            scale_ref[...] = scale
            shift_ref[...] = b_ref[...] - mean * scale

    return stats_kernel


def _norm_kernel(x_ref, scale_ref, shift_ref, o_ref):
    # fp32 affine (scale/shift stay fp32), single cast to the output dtype.
    x = x_ref[...].astype(jnp.float32)              # (nb, cb, lt)
    y = x * scale_ref[...] + shift_ref[...]         # (cb, 1) broadcast over lanes
    o_ref[...] = y.astype(o_ref.dtype)


def dynamic_batch_norm_2d_with_idx(x, weight, bias, active_idx, eps=1e-5):
    """x: (N, C, H, W) NCHW. weight/bias: (max_feature_dim,). active_idx: (C,)."""
    N, C, H, W = x.shape
    assert active_idx.shape[0] == C
    L = H * W
    itemsize = jnp.dtype(x.dtype).itemsize

    # Tiny per-channel gather (C elements) of the shared BN affine params.
    w_act = jnp.take(weight, active_idx, axis=0).reshape(C, 1).astype(jnp.float32)
    b_act = jnp.take(bias, active_idx, axis=0).reshape(C, 1).astype(jnp.float32)

    # Free reshape: native layout, channels on sublanes, H*W on lanes.
    x3 = x.reshape(N, C, L)

    budget = _vmem_budget_bytes()
    max_tile_bytes = min(4 * 1024 * 1024, budget // 6)

    # ---- tiling ------------------------------------------------------------
    cb = _pick_channel_block(C)
    n_cb = C // cb

    if L >= 128:
        total_chunks = _cdiv(L, 128)
        cap_chunks = max(1, min(64, L // 128,
                                max_tile_bytes // (cb * 128 * itemsize)))
        n_l_tiles = _cdiv(total_chunks, cap_chunks)
        # Balance chunks across lane-tiles so the padded remainder stays small;
        # lt <= L guarantees blocks never exceed the array extent.
        lt = min(_cdiv(total_chunks, n_l_tiles), L // 128) * 128
    else:
        lt = L                                   # full-extent lane block (< 128)
    n_lt = _cdiv(L, lt)
    need_mask = (L % lt) != 0                    # mask garbage lanes of the tail tile
    chunk_bounds = [(j * 128, min((j + 1) * 128, lt)) for j in range(_cdiv(lt, 128))]
    acc_w = min(128, lt)

    # Fold batch slices into the tile when a single (cb, lt) slice is small so
    # each grid step moves >= ~1 MiB (per-step overhead ~0.35 us).
    nb = 1
    per_slice = cb * lt * itemsize
    if per_slice < (1 << 20):
        for cand in range(N, 1, -1):
            if (N % cand == 0
                    and cand * per_slice <= max_tile_bytes
                    and cand * len(chunk_bounds) <= 64):
                nb = cand
                break
    n_nb = N // nb

    inv_count = 1.0 / float(N * L)
    x_tile_bytes = nb * cb * lt * itemsize
    stats_buffers = 3 if x_tile_bytes < (1 << 20) else 2

    grid = (n_cb, n_nb, n_lt)
    x_map = lambda c, n, l: (n, c, l)
    c_spec = lambda: pl.BlockSpec((cb, 1), lambda c, n, l: (c, 0))

    stats_kernel = _make_stats_kernel(float(eps), inv_count, nb, chunk_bounds,
                                      L, lt, need_mask)

    def _stats_call(x_spec):
        return pl.pallas_call(
            stats_kernel,
            out_shape=(jax.ShapeDtypeStruct((C, 1), jnp.float32),
                       jax.ShapeDtypeStruct((C, 1), jnp.float32)),
            grid_spec=pltpu.PrefetchScalarGridSpec(
                num_scalar_prefetch=0,
                grid=grid,
                in_specs=[x_spec, c_spec(), c_spec()],
                out_specs=[c_spec(), c_spec()],
                scratch_shapes=[pltpu.VMEM((cb, acc_w), jnp.float32),
                                pltpu.VMEM((cb, acc_w), jnp.float32)],
            ),
            compiler_params=pltpu.CompilerParams(
                dimension_semantics=("parallel", "arbitrary", "arbitrary"),
                vmem_limit_bytes=budget,
            ),
            cost_estimate=pl.CostEstimate(
                flops=3 * N * C * L, transcendentals=C,
                bytes_accessed=N * C * L * itemsize),
        )(x3, w_act, b_act)

    # ---- Pass 1: per-channel scale / shift ---------------------------------
    scale = shift = None
    if stats_buffers > 2:
        # Triple-buffer the streamed input to hide DMA latency behind the short
        # accumulator chain; degrade gracefully if pipeline_mode is unsupported.
        try:
            spec3 = pl.BlockSpec((nb, cb, lt), x_map,
                                 pipeline_mode=pl.Buffered(stats_buffers))
            scale, shift = _stats_call(spec3)
        except Exception:
            scale, shift = None, None
    if scale is None:
        scale, shift = _stats_call(pl.BlockSpec((nb, cb, lt), x_map))

    # ---- Pass 2: elementwise normalize (HBM-roofline bound) ----------------
    out3 = pl.pallas_call(
        _norm_kernel,
        out_shape=jax.ShapeDtypeStruct((N, C, L), x.dtype),
        grid_spec=pltpu.PrefetchScalarGridSpec(
            num_scalar_prefetch=0,
            grid=grid,
            in_specs=[
                pl.BlockSpec((nb, cb, lt), x_map),
                c_spec(),
                c_spec(),
            ],
            out_specs=pl.BlockSpec((nb, cb, lt), x_map),
        ),
        compiler_params=pltpu.CompilerParams(
            dimension_semantics=("parallel", "parallel", "parallel"),
            vmem_limit_bytes=budget,
        ),
        cost_estimate=pl.CostEstimate(
            flops=2 * N * C * L, transcendentals=0,
            bytes_accessed=2 * N * C * L * itemsize),
    )(x3, scale, shift)

    # Free reshape back to NCHW (no transpose anywhere).
    return out3.reshape(N, C, H, W)


def _reference(x, weight, bias, active_idx, eps=1e-5):
    w = jnp.take(weight, active_idx, axis=0)
    b = jnp.take(bias, active_idx, axis=0)
    mean = jnp.mean(x, axis=(0, 2, 3))
    var = jnp.mean(x * x, axis=(0, 2, 3)) - mean * mean
    invstd = lax.rsqrt(var + eps)
    scale = (w * invstd).reshape(1, -1, 1, 1)
    shift = (b - mean * w * invstd).reshape(1, -1, 1, 1)
    return x * scale + shift


if __name__ == "__main__":
    key = jax.random.PRNGKey(0)
    kx, kw, kb = jax.random.split(key, 3)

    max_feature_dim = 8            # BN parameters live at max width
    N, C, H, W = 2, 4, 16, 16      # active sub-network width C = 4

    x = jax.random.normal(kx, (N, C, H, W), dtype=jnp.float32)
    weight = jax.random.normal(kw, (max_feature_dim,), dtype=jnp.float32)
    bias = jax.random.normal(kb, (max_feature_dim,), dtype=jnp.float32)
    active_idx = jnp.array([0, 2, 5, 7], dtype=jnp.int32)  # len == C

    out = dynamic_batch_norm_2d_with_idx(x, weight, bias, active_idx)
    out = jax.block_until_ready(out)

    ref = _reference(x, weight, bias, active_idx)
    assert out.shape == (N, C, H, W)
    assert jnp.allclose(out, ref, atol=1e-4, rtol=1e-4)

    print("KERNEL_OK")
</pallas_src>

<mosaic_0001>
module attributes {stable_mosaic.version = 11 : i64} {
  func.func @stats_kernel(%arg0: i32, %arg1: i32, %arg2: i32, %arg3: memref<2x4x256xf32, #tpu.memory_space<vmem>>, %arg4: memref<4x1xf32, #tpu.memory_space<vmem>>, %arg5: memref<4x1xf32, #tpu.memory_space<vmem>>, %arg6: memref<4x1xf32, #tpu.memory_space<vmem>>, %arg7: memref<4x1xf32, #tpu.memory_space<vmem>>, %arg8: memref<4x128xf32, #tpu.memory_space<vmem>>, %arg9: memref<4x128xf32, #tpu.memory_space<vmem>>) attributes {dimension_semantics = [#tpu.dimension_semantics<parallel>, #tpu.dimension_semantics<arbitrary>, #tpu.dimension_semantics<arbitrary>], iteration_bounds = array<i64: 1, 1, 1>, scalar_prefetch = 0 : i64, scratch_operands = 2 : i64, tpu.core_type = #tpu.core_type<tc>, window_params = [{transform_indices = @transform_0, window_bounds = array<i64: 2, 4, 256>}, {transform_indices = @transform_1, window_bounds = array<i64: 4, 1>}, {transform_indices = @transform_2, window_bounds = array<i64: 4, 1>}, {transform_indices = @transform_3, window_bounds = array<i64: 4, 1>}, {transform_indices = @transform_4, window_bounds = array<i64: 4, 1>}]} {
    %c0_i32 = arith.constant 0 : i32
    %0 = arith.cmpi eq, %arg1, %c0_i32 : i32
    %c0_i32_0 = arith.constant 0 : i32
    %1 = arith.cmpi eq, %arg2, %c0_i32_0 : i32
    %2 = arith.andi %0, %1 : i1
    %3 = arith.extui %2 : i1 to i32
    %c0_i32_1 = arith.constant 0 : i32
    %4 = arith.cmpi ne, %3, %c0_i32_1 : i32
    scf.if %4 {
      %cst = arith.constant 0.000000e+00 : f32
      %34 = vector.broadcast %cst : f32 to vector<4x128xf32>
      %c0_22 = arith.constant 0 : index
      %c0_23 = arith.constant 0 : index
      %35 = vector.load %arg8[%c0_22, %c0_23] : memref<4x128xf32, #tpu.memory_space<vmem>>, vector<4x128xf32>
      tpu.vector_store %arg8[%c0_22, %c0_23], %34 {strides = array<i32>} : memref<4x128xf32, #tpu.memory_space<vmem>>, vector<4x128xf32>,
      %cst_24 = arith.constant 0.000000e+00 : f32
      %36 = vector.broadcast %cst_24 : f32 to vector<4x128xf32>
      %c0_25 = arith.constant 0 : index
      %c0_26 = arith.constant 0 : index
      %37 = vector.load %arg9[%c0_25, %c0_26] : memref<4x128xf32, #tpu.memory_space<vmem>>, vector<4x128xf32>
      tpu.vector_store %arg9[%c0_25, %c0_26], %36 {strides = array<i32>} : memref<4x128xf32, #tpu.memory_space<vmem>>, vector<4x128xf32>,
    } else {
    }
    %c0 = arith.constant 0 : index
    %c0_2 = arith.constant 0 : index
    %5 = vector.load %arg8[%c0, %c0_2] : memref<4x128xf32, #tpu.memory_space<vmem>>, vector<4x128xf32>
    %c0_3 = arith.constant 0 : index
    %c0_4 = arith.constant 0 : index
    %6 = vector.load %arg9[%c0_3, %c0_4] : memref<4x128xf32, #tpu.memory_space<vmem>>, vector<4x128xf32>
    %c0_5 = arith.constant 0 : index
    %c0_6 = arith.constant 0 : index
    %c0_7 = arith.constant 0 : index
    %7 = vector.load %arg3[%c0_5, %c0_6, %c0_7] : memref<2x4x256xf32, #tpu.memory_space<vmem>>, vector<1x4x128xf32>
    %8 = vector.shape_cast %7 : vector<1x4x128xf32> to vector<4x128xf32>
    %9 = arith.addf %5, %8 : vector<4x128xf32>
    %10 = arith.mulf %8, %8 : vector<4x128xf32>
    %11 = arith.addf %6, %10 : vector<4x128xf32>
    %c0_8 = arith.constant 0 : index
    %c0_9 = arith.constant 0 : index
    %c128 = arith.constant 128 : index
    %12 = vector.load %arg3[%c0_8, %c0_9, %c128] : memref<2x4x256xf32, #tpu.memory_space<vmem>>, vector<1x4x128xf32>
    %13 = vector.shape_cast %12 : vector<1x4x128xf32> to vector<4x128xf32>
    %14 = arith.addf %9, %13 : vector<4x128xf32>
    %15 = arith.mulf %13, %13 : vector<4x128xf32>
    %16 = arith.addf %11, %15 : vector<4x128xf32>
    %c1 = arith.constant 1 : index
    %c0_10 = arith.constant 0 : index
    %c0_11 = arith.constant 0 : index
    %17 = vector.load %arg3[%c1, %c0_10, %c0_11] : memref<2x4x256xf32, #tpu.memory_space<vmem>>, vector<1x4x128xf32>
    %18 = vector.shape_cast %17 : vector<1x4x128xf32> to vector<4x128xf32>
    %19 = arith.addf %14, %18 : vector<4x128xf32>
    %20 = arith.mulf %18, %18 : vector<4x128xf32>
    %21 = arith.addf %16, %20 : vector<4x128xf32>
    %c1_12 = arith.constant 1 : index
    %c0_13 = arith.constant 0 : index
    %c128_14 = arith.constant 128 : index
    %22 = vector.load %arg3[%c1_12, %c0_13, %c128_14] : memref<2x4x256xf32, #tpu.memory_space<vmem>>, vector<1x4x128xf32>
    %23 = vector.shape_cast %22 : vector<1x4x128xf32> to vector<4x128xf32>
    %24 = arith.addf %19, %23 : vector<4x128xf32>
    %25 = arith.mulf %23, %23 : vector<4x128xf32>
    %26 = arith.addf %21, %25 : vector<4x128xf32>
    %c0_15 = arith.constant 0 : index
    %c0_16 = arith.constant 0 : index
    %27 = vector.load %arg8[%c0_15, %c0_16] : memref<4x128xf32, #tpu.memory_space<vmem>>, vector<4x128xf32>
    tpu.vector_store %arg8[%c0_15, %c0_16], %24 {strides = array<i32>} : memref<4x128xf32, #tpu.memory_space<vmem>>, vector<4x128xf32>,
    %c0_17 = arith.constant 0 : index
    %c0_18 = arith.constant 0 : index
    %28 = vector.load %arg9[%c0_17, %c0_18] : memref<4x128xf32, #tpu.memory_space<vmem>>, vector<4x128xf32>
    tpu.vector_store %arg9[%c0_17, %c0_18], %26 {strides = array<i32>} : memref<4x128xf32, #tpu.memory_space<vmem>>, vector<4x128xf32>,
    %c0_i32_19 = arith.constant 0 : i32
    %29 = arith.cmpi eq, %arg1, %c0_i32_19 : i32
    %c0_i32_20 = arith.constant 0 : i32
    %30 = arith.cmpi eq, %arg2, %c0_i32_20 : i32
    %31 = arith.andi %29, %30 : i1
    %32 = arith.extui %31 : i1 to i32
    %c0_i32_21 = arith.constant 0 : i32
    %33 = arith.cmpi ne, %32, %c0_i32_21 : i32
    scf.if %33 {
      %c0_22 = arith.constant 0 : index
      %c0_23 = arith.constant 0 : index
      %34 = vector.load %arg8[%c0_22, %c0_23] : memref<4x128xf32, #tpu.memory_space<vmem>>, vector<4x128xf32>
      %cst = arith.constant dense<0.000000e+00> : vector<4xf32>
      %35 = vector.multi_reduction <add>, %34, %cst [1] : vector<4x128xf32> to vector<4xf32>
      %36 = vector.shape_cast %35 : vector<4xf32> to vector<4x1xf32>
      %c0_24 = arith.constant 0 : index
      %c0_25 = arith.constant 0 : index
      %37 = vector.load %arg9[%c0_24, %c0_25] : memref<4x128xf32, #tpu.memory_space<vmem>>, vector<4x128xf32>
      %cst_26 = arith.constant dense<0.000000e+00> : vector<4xf32>
      %38 = vector.multi_reduction <add>, %37, %cst_26 [1] : vector<4x128xf32> to vector<4xf32>
      %39 = vector.shape_cast %38 : vector<4xf32> to vector<4x1xf32>
      %cst_27 = arith.constant 0.001953125 : f32
      %40 = vector.broadcast %cst_27 : f32 to vector<4x1xf32>
      %41 = arith.mulf %36, %40 : vector<4x1xf32>
      %cst_28 = arith.constant 0.001953125 : f32
      %42 = vector.broadcast %cst_28 : f32 to vector<4x1xf32>
      %43 = arith.mulf %39, %42 : vector<4x1xf32>
      %44 = arith.mulf %41, %41 : vector<4x1xf32>
      %45 = arith.subf %43, %44 : vector<4x1xf32>
      %cst_29 = arith.constant 9.99999974E-6 : f32
      %46 = vector.broadcast %cst_29 : f32 to vector<4x1xf32>
      %47 = arith.addf %45, %46 : vector<4x1xf32>
      %48 = math.rsqrt %47 : vector<4x1xf32>
      %c0_30 = arith.constant 0 : index
      %c0_31 = arith.constant 0 : index
      %49 = vector.load %arg4[%c0_30, %c0_31] : memref<4x1xf32, #tpu.memory_space<vmem>>, vector<4x1xf32>
      %50 = arith.mulf %49, %48 : vector<4x1xf32>
      %c0_32 = arith.constant 0 : index
      %c0_33 = arith.constant 0 : index
      %51 = vector.load %arg6[%c0_32, %c0_33] : memref<4x1xf32, #tpu.memory_space<vmem>>, vector<4x1xf32>
      tpu.vector_store %arg6[%c0_32, %c0_33], %50 {strides = array<i32>} : memref<4x1xf32, #tpu.memory_space<vmem>>, vector<4x1xf32>,
      %c0_34 = arith.constant 0 : index
      %c0_35 = arith.constant 0 : index
      %52 = vector.load %arg5[%c0_34, %c0_35] : memref<4x1xf32, #tpu.memory_space<vmem>>, vector<4x1xf32>
      %53 = arith.mulf %41, %50 : vector<4x1xf32>
      %54 = arith.subf %52, %53 : vector<4x1xf32>
      %c0_36 = arith.constant 0 : index
      %c0_37 = arith.constant 0 : index
      %55 = vector.load %arg7[%c0_36, %c0_37] : memref<4x1xf32, #tpu.memory_space<vmem>>, vector<4x1xf32>
      tpu.vector_store %arg7[%c0_36, %c0_37], %54 {strides = array<i32>} : memref<4x1xf32, #tpu.memory_space<vmem>>, vector<4x1xf32>,
    } else {
    }
    return
  }
  func.func @transform_0(%arg0: i32, %arg1: i32, %arg2: i32) -> (i32, i32, i32) {
    %c0_i32 = arith.constant 0 : i32
    return %arg1, %arg0, %arg2 : i32, i32, i32
  }
  func.func @transform_1(%arg0: i32, %arg1: i32, %arg2: i32) -> (i32, i32) {
    %c0_i32 = arith.constant 0 : i32
    %c0_i32_0 = arith.constant 0 : i32
    return %arg0, %c0_i32 : i32, i32
  }
  func.func @transform_2(%arg0: i32, %arg1: i32, %arg2: i32) -> (i32, i32) {
    %c0_i32 = arith.constant 0 : i32
    %c0_i32_0 = arith.constant 0 : i32
    return %arg0, %c0_i32 : i32, i32
  }
  func.func @transform_3(%arg0: i32, %arg1: i32, %arg2: i32) -> (i32, i32) {
    %c0_i32 = arith.constant 0 : i32
    %c0_i32_0 = arith.constant 0 : i32
    return %arg0, %c0_i32 : i32, i32
  }
  func.func @transform_4(%arg0: i32, %arg1: i32, %arg2: i32) -> (i32, i32) {
    %c0_i32 = arith.constant 0 : i32
    %c0_i32_0 = arith.constant 0 : i32
    return %arg0, %c0_i32 : i32, i32
  }
}

</mosaic_0001>

<llo_original>
// kernel: tpu_custom_call.1
$region0: #{tpu_custom_call.1}
  #allocation0 [shape = 'u32[]', space=smem, size = 0x4, offset = 0x4, fixed_abs, tag = 'smem constant byte address 0x4 - core index']
  #allocation1 [shape = 'u32[144,128]{1,0:T(1,128)}', space=vmem, size = 0x12000, scoped, tag = 'internal scratch']
  #allocation2 [shape = 'f32[4,128]{1,0:T(4,128)}', space=vmem, size = 0x800, scoped, tag = 'scratch operand']
  #allocation3 [shape = 'f32[4,128]{1,0:T(4,128)}', space=vmem, size = 0x800, scoped, tag = 'scratch operand']
  %s0 = inlined_call_operand.hbm [shape: f32[2,4,256], index: 0, kind: input, shape index: {}]
  %s1 = inlined_call_operand.hbm [shape: f32[4,1], index: 1, kind: input, shape index: {}]
  %s2 = inlined_call_operand.hbm [shape: f32[4,1], index: 2, kind: input, shape index: {}]
  %s3 = inlined_call_operand.hbm [shape: f32[4,1], index: 3, kind: output, shape index: {0}]
  %s4 = inlined_call_operand.hbm [shape: f32[4,1], index: 4, kind: output, shape index: {1}]
  %5 = xla_tuple %s3, %s4
  %s6 = sld [smem:[#allocation0]]
  $region50: #{tpu_custom_call.1} parent=0
    _
  %s8 = ssub.s32 1, %s6
  %s9 = scalar_select 0, %s8, %s6
  $region1: #{tpu_custom_call.1} parent=0
    #allocation4 [shape = 'u8[8192]{0}', space=vmem, size = 0x2000, scoped, tag = 'input window, operand 0, single buffered']
    #allocation5 [shape = 's32[1]{0}', space=sflag, size = 0x4, scoped, tag = 'scoped memory for tpu_custom_call.1']
    #allocation6 [shape = 's32[1]{0}', space=sflag, size = 0x4, scoped, tag = 'scoped memory for tpu_custom_call.1']
    #allocation7 [shape = 'u8[2048]{0}', space=vmem, size = 0x800, scoped, tag = 'input window, operand 1, single buffered']
    #allocation8 [shape = 's32[1]{0}', space=sflag, size = 0x4, scoped, tag = 'scoped memory for tpu_custom_call.1']
    #allocation9 [shape = 'u8[2048]{0}', space=vmem, size = 0x800, scoped, tag = 'input window, operand 2, single buffered']
    #allocation10 [shape = 'u8[2048]{0}', space=vmem, size = 0x800, scoped, tag = 'output window, operand 0, single buffered']
    #allocation11 [shape = 'u8[2048]{0}', space=vmem, size = 0x800, scoped, tag = 'output window, operand 1, single buffered']
    #allocation12 [shape = 's32[1]{0}', space=sflag, size = 0x4, scoped, tag = 'scoped memory for tpu_custom_call.1']
    %10 = vsyncpa [#allocation5], 0
    %11 = vsyncpa [#allocation8], 0
    %12 = vsyncpa [#allocation6], 0
    %13 = vsyncpa [#allocation12], 0
    // Predicated region
    $region2: #{tpu_custom_call.1} parent=1 // pred_check
      _
    $region3: #{tpu_custom_call.1} parent=1 // pred_check_branch
      %15 = sbr.rel (0) target = $region5
    $region4: #{tpu_custom_call.1} parent=1 // pred_region
      %s17 = ssub.s32 256, 256
      %18 = vsyncadd [#allocation5], %s17
      %s19 = sshll.u32 [#allocation4], 4
      %s20 = int_to_ptr.vmem [resolvable:$true] %s19
      %25 = dma.hbm_to_vmem [thread:$0]  %s0, 256, %s20, [#allocation5], 128, 128, 8
    $region5: #{tpu_custom_call.1} parent=1 // pred_fallthru
      _
    // Predicated region
    $region6: #{tpu_custom_call.1} parent=1 // pred_check
      _
    $region7: #{tpu_custom_call.1} parent=1 // pred_check_branch
      %27 = sbr.rel (0) target = $region9
    $region8: #{tpu_custom_call.1} parent=1 // pred_region
      %s29 = ssub.s32 64, 64
      %30 = vsyncadd [#allocation8], %s29
      %s32 = sshll.u32 [#allocation7], 4
      %s33 = int_to_ptr.vmem [resolvable:$true] %s32
      %35 = dma.hbm_to_vmem [thread:$0]  %s1, 64, %s33, [#allocation8]
    $region9: #{tpu_custom_call.1} parent=1 // pred_fallthru
      _
    // Predicated region
    $region10: #{tpu_custom_call.1} parent=1 // pred_check
      _
    $region11: #{tpu_custom_call.1} parent=1 // pred_check_branch
      %37 = sbr.rel (0) target = $region13
    $region12: #{tpu_custom_call.1} parent=1 // pred_region
      %s39 = ssub.s32 64, 64
      %40 = vsyncadd [#allocation8], %s39
      %s42 = sshll.u32 [#allocation9], 4
      %s43 = int_to_ptr.vmem [resolvable:$true] %s42
      %45 = dma.hbm_to_vmem [thread:$0]  %s2, 64, %s43, [#allocation8]
    $region13: #{tpu_custom_call.1} parent=1 // pred_fallthru
      _
    // Predicated region
    $region14: #{tpu_custom_call.1} parent=1 // pred_check
      _
    $region15: #{tpu_custom_call.1} parent=1 // pred_check_branch
      %47 = sbr.rel (0) target = $region17
    $region16: #{tpu_custom_call.1} parent=1 // pred_region
      %48 = dma.done [#allocation5], 256
    $region17: #{tpu_custom_call.1} parent=1 // pred_fallthru
      _
    // Predicated region
    $region18: #{tpu_custom_call.1} parent=1 // pred_check
      _
    $region19: #{tpu_custom_call.1} parent=1 // pred_check_branch
      %50 = sbr.rel (0) target = $region21
    $region20: #{tpu_custom_call.1} parent=1 // pred_region
      %51 = dma.done [#allocation8], 64
    $region21: #{tpu_custom_call.1} parent=1 // pred_fallthru
      _
    // Predicated region
    $region22: #{tpu_custom_call.1} parent=1 // pred_check
      _
    $region23: #{tpu_custom_call.1} parent=1 // pred_check_branch
      %53 = sbr.rel (0) target = $region25
    $region24: #{tpu_custom_call.1} parent=1 // pred_region
      %54 = dma.done [#allocation8], 64
    $region25: #{tpu_custom_call.1} parent=1 // pred_fallthru
      _
    %p55 = scmp.eq.s32.totalorder 0, 0
    %p56 = scmp.eq.s32.totalorder 0, 0
    %p57 = pnand %p55, %p56
    %p58 = pneg %p57
    // Predicated region
    $region26: #{tpu_custom_call.1} parent=1 // pred_check
      _
    $region27: #{tpu_custom_call.1} parent=1 // pred_check_branch
      %60 = sbr.rel (%p57) target = $region29
    $region28: #{tpu_custom_call.1} parent=1 // pred_region
      %61 = vst [vmem:[#allocation2] sm:$0xf] 0.0
      %62 = vst [vmem:[#allocation3] sm:$0xf] 0.0
    $region29: #{tpu_custom_call.1} parent=1 // pred_fallthru
      _
    %v63 = vld [vmem:[#allocation2] sm:$0xf]
    %v64 = vld [vmem:[#allocation3] sm:$0xf]
    %v65 = vld [vmem:[#allocation4] sm:$0xf]
    %v66 = vadd.f32 %v63, %v65
    %v67 = vmul.f32 %v65, %v65
    %v68 = vadd.f32 %v64, %v67
    %v69 = vld [vmem:[#allocation4 + $0x4] sm:$0xf]
    %v70 = vadd.f32 %v66, %v69
    %v71 = vmul.f32 %v69, %v69
    %v72 = vadd.f32 %v68, %v71
    %s73 = scalar_lea.vmem [#allocation4], 8
    %v74 = vld [vmem:[%s73] sm:$0xf]
    %v75 = vadd.f32 %v70, %v74
    %v76 = vmul.f32 %v74, %v74
    %v77 = vadd.f32 %v72, %v76
    %v78 = vld [vmem:[%s73 + $0x4] sm:$0xf]
    %v79 = vadd.f32 %v75, %v78
    %v80 = vmul.f32 %v78, %v78
    %v81 = vadd.f32 %v77, %v80
    %82 = vst [vmem:[#allocation2] sm:$0xf] %v79
    %83 = vst [vmem:[#allocation3] sm:$0xf] %v81
    // Predicated region
    $region30: #{tpu_custom_call.1} parent=1 // pred_check
      _
    $region31: #{tpu_custom_call.1} parent=1 // pred_check_branch
      %85 = sbr.rel (%p57) target = $region33
    $region32: #{tpu_custom_call.1} parent=1 // pred_region
      %v86 = vld [vmem:[#allocation2] sm:$0xf]
      %vm87 = vcmask 1043456
      %v88 = vsel %vm87, %v86, 0.0
      %89 = vadd.xlane.f32.xlu0 %v88
      %v90 = vpop.xlane.xlu0 %89
      %v91 = vld [vmem:[#allocation3] sm:$0xf]
      %v92 = vsel %vm87, %v91, 0.0
      %93 = vadd.xlane.f32.xlu0 %v92
      %v94 = vpop.xlane.xlu0 %93
      %v95 = vmul.f32 %v90, 0.001953125
      %v96 = vmul.f32 %v94, 0.001953125
      %v97 = vmul.f32 %v95, %v95
      %v98 = vsub.f32 %v96, %v97
      %v99 = vadd.f32 %v98, 1e-05
      %v100 = vrsqrt.pop %v99
      %v101 = vld [vmem:[#allocation7] sm:$0xf]
      %v102 = vmul.f32 %v101, %v100
      %vm103 = vcmask 3072
      %104 = vst.msk [vmem:[#allocation10] sm:$0xf] %vm103, %v102
      %v105 = vld [vmem:[#allocation9] sm:$0xf]
      %v106 = vmul.f32 %v95, %v102
      %v107 = vsub.f32 %v105, %v106
      %108 = vst.msk [vmem:[#allocation11] sm:$0xf] %vm103, %v107
    $region33: #{tpu_custom_call.1} parent=1 // pred_fallthru
      _
    // Predicated region
    $region34: #{tpu_custom_call.1} parent=1 // pred_check
      _
    $region35: #{tpu_custom_call.1} parent=1 // pred_check_branch
      %110 = sbr.rel (0) target = $region37
    $region36: #{tpu_custom_call.1} parent=1 // pred_region
      %s112 = ssub.s32 64, 64
      %113 = vsyncadd [#allocation6], %s112
      %s115 = sshll.u32 [#allocation10], 4
      %s116 = int_to_ptr.vmem [resolvable:$true] %s115
      %118 = dma.vmem_to_hbm [thread:$0]  %s116, 64, %s3, [#allocation6]
    $region37: #{tpu_custom_call.1} parent=1 // pred_fallthru
      _
    // Predicated region
    $region38: #{tpu_custom_call.1} parent=1 // pred_check
      _
    $region39: #{tpu_custom_call.1} parent=1 // pred_check_branch
      %120 = sbr.rel (0) target = $region41
    $region40: #{tpu_custom_call.1} parent=1 // pred_region
      %s122 = ssub.s32 64, 64
      %123 = vsyncadd [#allocation12], %s122
      %s125 = sshll.u32 [#allocation11], 4
      %s126 = int_to_ptr.vmem [resolvable:$true] %s125
      %128 = dma.vmem_to_hbm [thread:$0]  %s126, 64, %s4, [#allocation12]
    $region41: #{tpu_custom_call.1} parent=1 // pred_fallthru
      _
    // Predicated region
    $region42: #{tpu_custom_call.1} parent=1 // pred_check
      _
    $region43: #{tpu_custom_call.1} parent=1 // pred_check_branch
      %130 = sbr.rel (0) target = $region45
    $region44: #{tpu_custom_call.1} parent=1 // pred_region
      %131 = dma.done [#allocation6], 64
    $region45: #{tpu_custom_call.1} parent=1 // pred_fallthru
      _
    // Predicated region
    $region46: #{tpu_custom_call.1} parent=1 // pred_check
      _
    $region47: #{tpu_custom_call.1} parent=1 // pred_check_branch
      %133 = sbr.rel (0) target = $region49
    $region48: #{tpu_custom_call.1} parent=1 // pred_region
      %134 = dma.done [#allocation12], 64
    $region49: #{tpu_custom_call.1} parent=1 // pred_fallthru
      _
    %135 = vsyncpa [#allocation5], 1
    %136 = vsyncpa [#allocation8], 1
    %137 = vsyncpa [#allocation6], 1
    %138 = vsyncpa [#allocation12], 1

</llo_original>
